<compile_context>
chip_gen: v5e
topology: v5e:2x2
jax: 0.10.0
libtpu: 0.0.40
codegen_flags: <defaults>
</compile_context>

<pallas_src>
import functools

import jax
import jax.numpy as jnp
from jax.experimental import pallas as pl
from jax.experimental.pallas import tpu as pltpu


# ----------------------------------------------------------------------------
# Fused Pallas kernel: all CasualConvBlocks + AdaptiveAvgPool1d + Linear head
# ----------------------------------------------------------------------------
def _fused_tcn_kernel(*refs, meta, bt, T):
    """One grid step processes `bt` batch elements through the whole network.

    refs layout (inputs, then the single output):
      x_ref            (bt, T, Cin0)
      bn0_scale/shift  (1, Cin0)            initial BatchNorm1d (eval affine)
      per layer:
        w_cat          (K*Cin, Cout) bf16   im2col conv weights (weight-normed)
        scale, shift   (1, Cout)    f32     folded conv bias + eval BatchNorm
        [skip_w        (Cin, Cout)  bf16    only when Cin != Cout
         skip_b        (1, Cout)    f32 ]
      w_lin            (F, ncls), b_lin (1, ncls)
      out_ref          (bt, 1, ncls)
    """
    idx = 0
    x_ref = refs[idx]; idx += 1
    bn0_s_ref = refs[idx]; idx += 1
    bn0_b_ref = refs[idx]; idx += 1
    layer_refs = []
    for m in meta:
        n = 5 if m["has_skip"] else 3
        layer_refs.append(refs[idx:idx + n]); idx += n
    w_lin_ref = refs[idx]; idx += 1
    b_lin_ref = refs[idx]; idx += 1
    out_ref = refs[idx]

    # Initial BatchNorm1d (eval-mode affine) on the raw input.
    h = x_ref[...].astype(jnp.float32)                         # (bt, T, Cin0)
    h = h * bn0_s_ref[...] + bn0_b_ref[...]

    for m, lr in zip(meta, layer_refs):
        K, dil, cin, cout = m["K"], m["dil"], m["cin"], m["cout"]
        pad = (K - 1) * dil

        # Causal left padding (Conv1d pad=(K-1)*dil followed by Chomp1d(pad)),
        # then im2col: concat the K shifted views along the channel/lane axis.
        hpad = jnp.concatenate(
            [jnp.zeros((bt, pad, cin), jnp.float32), h], axis=1)   # (bt,T+pad,cin)
        cols = jnp.concatenate(
            [hpad[:, k * dil:k * dil + T, :] for k in range(K)],
            axis=-1)                                               # (bt,T,K*cin)
        cols = cols.reshape(bt * T, K * cin).astype(jnp.bfloat16)

        # Single MXU matmul per block (bf16 operands, f32 accumulation).
        acc = jnp.dot(cols, lr[0][...],
                      preferred_element_type=jnp.float32)          # (bt*T, cout)

        # Folded conv bias + eval BatchNorm, ReLU.  Dropout: identity in eval.
        y = jnp.maximum(acc * lr[1][...] + lr[2][...], 0.0)

        # Res-connect skip: 1x1 conv if channels change, else plain add
        # (identity projection statically elided).
        hflat = h.reshape(bt * T, cin)
        if m["has_skip"]:
            res = jnp.dot(hflat.astype(jnp.bfloat16), lr[3][...],
                          preferred_element_type=jnp.float32) + lr[4][...]
        else:
            res = hflat
        h = (y + res).reshape(bt, T, cout)

    # AdaptiveAvgPool1d(1) over time + Linear head, all in VMEM (never to HBM).
    pooled = jnp.mean(h, axis=1)                                   # (bt, F)
    logits = jnp.dot(pooled, w_lin_ref[...],
                     preferred_element_type=jnp.float32) + b_lin_ref[...]
    out_ref[...] = logits[:, None, :].astype(out_ref.dtype)


# ----------------------------------------------------------------------------
# Wrapper
# ----------------------------------------------------------------------------
def _pick_batch_tile(B):
    """Largest divisor of B that still leaves >=2 grid steps (megacore)."""
    if B <= 1:
        return 1
    for bt in range(max(1, B // 2), 0, -1):
        if B % bt == 0:
            return bt
    return 1


def uitcn_forward(x, params, reverse=False):
    """x: (B, 1, C_in, T) float32 -> logits (B, num_classes)."""
    xb = x[:, 0]                                      # squeeze(1) -> (B, C, T)
    if reverse:
        xb = jnp.flip(xb, axis=2)                     # torch.flip(dims=[2])
    h = jnp.transpose(xb, (0, 2, 1)).astype(jnp.float32)      # (B, T, C)
    B, T, Cin0 = h.shape
    F, ncls = params["w_lin"].shape
    bt = _pick_batch_tile(B)
    grid = (B // bt,)

    args = [h, params["bn0_scale"], params["bn0_shift"]]
    in_specs = [
        pl.BlockSpec((bt, T, Cin0), lambda i: (i, 0, 0)),
        pl.BlockSpec((1, Cin0), lambda i: (0, 0)),
        pl.BlockSpec((1, Cin0), lambda i: (0, 0)),
    ]
    meta = []
    for lyr in params["layers"]:
        K, dil = lyr["K"], lyr["dil"]
        cin, cout, has_skip = lyr["cin"], lyr["cout"], lyr["has_skip"]
        meta.append(dict(K=K, dil=dil, cin=cin, cout=cout, has_skip=has_skip))
        args += [lyr["w_cat"], lyr["scale"], lyr["shift"]]
        in_specs += [
            pl.BlockSpec((K * cin, cout), lambda i: (0, 0)),
            pl.BlockSpec((1, cout), lambda i: (0, 0)),
            pl.BlockSpec((1, cout), lambda i: (0, 0)),
        ]
        if has_skip:
            args += [lyr["skip_w"], lyr["skip_b"]]
            in_specs += [
                pl.BlockSpec((cin, cout), lambda i: (0, 0)),
                pl.BlockSpec((1, cout), lambda i: (0, 0)),
            ]
    args += [params["w_lin"], params["b_lin"]]
    in_specs += [pl.BlockSpec((F, ncls), lambda i: (0, 0)),
                 pl.BlockSpec((1, ncls), lambda i: (0, 0))]

    kern = functools.partial(_fused_tcn_kernel, meta=tuple(meta), bt=bt, T=T)
    out = pl.pallas_call(
        kern,
        out_shape=jax.ShapeDtypeStruct((B, 1, ncls), jnp.float32),
        grid=grid,
        in_specs=in_specs,
        out_specs=pl.BlockSpec((bt, 1, ncls), lambda i: (i, 0, 0)),
        compiler_params=pltpu.CompilerParams(
            dimension_semantics=("parallel",)),
    )(*args)
    return out[:, 0, :]


# ----------------------------------------------------------------------------
# Deterministic parameter construction (matches module __init__ shapes)
# ----------------------------------------------------------------------------
def init_params(key, in_channels, num_filters, kernel_sizes, dilations,
                num_classes):
    eps = 1e-5
    # Initial BatchNorm1d(in_channels), freshly initialized, eval mode.
    bn0_scale = jnp.full((1, in_channels), 1.0 / jnp.sqrt(1.0 + eps),
                         jnp.float32)
    bn0_shift = jnp.zeros((1, in_channels), jnp.float32)

    layers = []
    cin = in_channels
    for i, cout in enumerate(num_filters):
        lk = jax.random.fold_in(key, i)
        k0, k1, k2, k3, k4 = jax.random.split(lk, 5)
        K, dil = int(kernel_sizes[i]), int(dilations[i])

        # weight_norm(Conv1d): v (Cout, Cin, K), g (Cout,);  w = g * v / ||v||
        v = 0.3 * jax.random.normal(k0, (cout, cin, K), jnp.float32)
        g = 0.5 + jax.random.uniform(k1, (cout,), jnp.float32)
        vnorm = jnp.sqrt(jnp.sum(v * v, axis=(1, 2)) + 1e-12)
        w_eff = (g / vnorm)[:, None, None] * v                 # (Cout, Cin, K)
        w_stack = jnp.transpose(w_eff, (2, 1, 0))              # (K, Cin, Cout)
        w_cat = w_stack.reshape(K * cin, cout).astype(jnp.bfloat16)
        b_conv = 0.1 * jax.random.normal(k2, (cout,), jnp.float32)

        # Freshly-initialized BatchNorm1d in eval mode, folded with conv bias.
        gamma = jnp.ones((cout,), jnp.float32)
        beta = jnp.zeros((cout,), jnp.float32)
        r_mean = jnp.zeros((cout,), jnp.float32)
        r_var = jnp.ones((cout,), jnp.float32)
        scale = gamma / jnp.sqrt(r_var + eps)
        shift = (b_conv - r_mean) * scale + beta

        has_skip = (cin != cout)
        lyr = dict(K=K, dil=dil, cin=cin, cout=cout, has_skip=has_skip,
                   w_cat=w_cat,
                   scale=scale.reshape(1, cout),
                   shift=shift.reshape(1, cout))
        if has_skip:  # Res-connect skip: 1x1 conv when channel count changes.
            lyr["skip_w"] = (0.3 * jax.random.normal(
                k3, (cin, cout), jnp.float32)).astype(jnp.bfloat16)
            lyr["skip_b"] = (0.1 * jax.random.normal(
                k4, (cout,), jnp.float32)).reshape(1, cout)
        layers.append(lyr)
        cin = cout

    hk0, hk1 = jax.random.split(jax.random.fold_in(key, 10_000))
    F = num_filters[-1]
    w_lin = 0.3 * jax.random.normal(hk0, (F, num_classes), jnp.float32)  # W.T
    b_lin = 0.1 * jax.random.normal(hk1, (1, num_classes), jnp.float32)
    return dict(bn0_scale=bn0_scale, bn0_shift=bn0_shift,
                layers=layers, w_lin=w_lin, b_lin=b_lin)


# ----------------------------------------------------------------------------
# Pure-JAX reference (same math, no Pallas) for correctness checking
# ----------------------------------------------------------------------------
def ref_forward(x, params, reverse=False):
    xb = x[:, 0]
    if reverse:
        xb = jnp.flip(xb, axis=2)
    h = jnp.transpose(xb, (0, 2, 1)).astype(jnp.float32)
    h = h * params["bn0_scale"] + params["bn0_shift"]
    for lyr in params["layers"]:
        K, dil, cin, cout = lyr["K"], lyr["dil"], lyr["cin"], lyr["cout"]
        B, T, _ = h.shape
        pad = (K - 1) * dil
        hpad = jnp.concatenate(
            [jnp.zeros((B, pad, cin), jnp.float32), h], axis=1)
        w = lyr["w_cat"].reshape(K, cin, cout)                 # bf16
        acc = jnp.zeros((B, T, cout), jnp.float32)
        for k in range(K):
            xk = hpad[:, k * dil: k * dil + T, :].astype(jnp.bfloat16)
            acc = acc + jnp.einsum("btc,cf->btf", xk, w[k],
                                   preferred_element_type=jnp.float32)
        y = jnp.maximum(acc * lyr["scale"] + lyr["shift"], 0.0)
        if lyr["has_skip"]:
            res = jnp.einsum("btc,cf->btf", h.astype(jnp.bfloat16),
                             lyr["skip_w"],
                             preferred_element_type=jnp.float32) + lyr["skip_b"]
        else:
            res = h
        h = y + res
    m = jnp.mean(h, axis=1)
    return m @ params["w_lin"] + params["b_lin"]


# ----------------------------------------------------------------------------
if __name__ == "__main__":
    # Small hyper-params consistent with the module's forward.
    B, C_IN, T = 2, 4, 16
    NUM_FILTERS = [8, 16, 16]       # last block exercises the identity skip
    KERNEL_SIZES = [3, 3, 3]
    DILATIONS = [1, 2, 4]
    NUM_CLASSES = 5
    REVERSE = False

    root = jax.random.PRNGKey(0)
    pkey, xkey = jax.random.split(root)
    params = init_params(pkey, C_IN, NUM_FILTERS, KERNEL_SIZES, DILATIONS,
                         NUM_CLASSES)
    x = jax.random.normal(xkey, (B, 1, C_IN, T), jnp.float32)

    out = jax.block_until_ready(uitcn_forward(x, params, reverse=REVERSE))
    ref = jax.block_until_ready(ref_forward(x, params, reverse=REVERSE))

    assert out.shape == (B, NUM_CLASSES)
    assert jnp.allclose(out, ref, rtol=1e-4, atol=1e-4), (out, ref)

    print("KERNEL_OK")
</pallas_src>

<mosaic_0001>
module attributes {stable_mosaic.version = 11 : i64} {
  func.func @_fused_tcn_kernel(%arg0: i32, %arg1: memref<1x16x4xf32, #tpu.memory_space<vmem>>, %arg2: memref<1x4xf32, #tpu.memory_space<vmem>>, %arg3: memref<1x4xf32, #tpu.memory_space<vmem>>, %arg4: memref<12x8xbf16, #tpu.memory_space<vmem>>, %arg5: memref<1x8xf32, #tpu.memory_space<vmem>>, %arg6: memref<1x8xf32, #tpu.memory_space<vmem>>, %arg7: memref<4x8xbf16, #tpu.memory_space<vmem>>, %arg8: memref<1x8xf32, #tpu.memory_space<vmem>>, %arg9: memref<24x16xbf16, #tpu.memory_space<vmem>>, %arg10: memref<1x16xf32, #tpu.memory_space<vmem>>, %arg11: memref<1x16xf32, #tpu.memory_space<vmem>>, %arg12: memref<8x16xbf16, #tpu.memory_space<vmem>>, %arg13: memref<1x16xf32, #tpu.memory_space<vmem>>, %arg14: memref<48x16xbf16, #tpu.memory_space<vmem>>, %arg15: memref<1x16xf32, #tpu.memory_space<vmem>>, %arg16: memref<1x16xf32, #tpu.memory_space<vmem>>, %arg17: memref<16x5xf32, #tpu.memory_space<vmem>>, %arg18: memref<1x5xf32, #tpu.memory_space<vmem>>, %arg19: memref<1x1x5xf32, #tpu.memory_space<vmem>>) attributes {dimension_semantics = [#tpu.dimension_semantics<parallel>], iteration_bounds = array<i64: 2>, scalar_prefetch = 0 : i64, scratch_operands = 0 : i64, tpu.core_type = #tpu.core_type<tc>, window_params = [{transform_indices = @transform_0, window_bounds = array<i64: 1, 16, 4>}, {pipeline_mode = #tpu.pipeline_mode<synchronous>, transform_indices = @transform_1, window_bounds = array<i64: 1, 4>}, {pipeline_mode = #tpu.pipeline_mode<synchronous>, transform_indices = @transform_2, window_bounds = array<i64: 1, 4>}, {pipeline_mode = #tpu.pipeline_mode<synchronous>, transform_indices = @transform_3, window_bounds = array<i64: 12, 8>}, {pipeline_mode = #tpu.pipeline_mode<synchronous>, transform_indices = @transform_4, window_bounds = array<i64: 1, 8>}, {pipeline_mode = #tpu.pipeline_mode<synchronous>, transform_indices = @transform_5, window_bounds = array<i64: 1, 8>}, {pipeline_mode = #tpu.pipeline_mode<synchronous>, transform_indices = @transform_6, window_bounds = array<i64: 4, 8>}, {pipeline_mode = #tpu.pipeline_mode<synchronous>, transform_indices = @transform_7, window_bounds = array<i64: 1, 8>}, {pipeline_mode = #tpu.pipeline_mode<synchronous>, transform_indices = @transform_8, window_bounds = array<i64: 24, 16>}, {pipeline_mode = #tpu.pipeline_mode<synchronous>, transform_indices = @transform_9, window_bounds = array<i64: 1, 16>}, {pipeline_mode = #tpu.pipeline_mode<synchronous>, transform_indices = @transform_10, window_bounds = array<i64: 1, 16>}, {pipeline_mode = #tpu.pipeline_mode<synchronous>, transform_indices = @transform_11, window_bounds = array<i64: 8, 16>}, {pipeline_mode = #tpu.pipeline_mode<synchronous>, transform_indices = @transform_12, window_bounds = array<i64: 1, 16>}, {pipeline_mode = #tpu.pipeline_mode<synchronous>, transform_indices = @transform_13, window_bounds = array<i64: 48, 16>}, {pipeline_mode = #tpu.pipeline_mode<synchronous>, transform_indices = @transform_14, window_bounds = array<i64: 1, 16>}, {pipeline_mode = #tpu.pipeline_mode<synchronous>, transform_indices = @transform_15, window_bounds = array<i64: 1, 16>}, {pipeline_mode = #tpu.pipeline_mode<synchronous>, transform_indices = @transform_16, window_bounds = array<i64: 16, 5>}, {pipeline_mode = #tpu.pipeline_mode<synchronous>, transform_indices = @transform_17, window_bounds = array<i64: 1, 5>}, {transform_indices = @transform_18, window_bounds = array<i64: 1, 1, 5>}]} {
    %c0 = arith.constant 0 : index
    %c0_0 = arith.constant 0 : index
    %c0_1 = arith.constant 0 : index
    %0 = vector.load %arg1[%c0, %c0_0, %c0_1] : memref<1x16x4xf32, #tpu.memory_space<vmem>>, vector<1x16x4xf32>
    %c0_2 = arith.constant 0 : index
    %c0_3 = arith.constant 0 : index
    %1 = vector.load %arg2[%c0_2, %c0_3] : memref<1x4xf32, #tpu.memory_space<vmem>>, vector<1x4xf32>
    %2 = vector.shape_cast %1 : vector<1x4xf32> to vector<1x1x4xf32>
    %3 = vector.broadcast %2 : vector<1x1x4xf32> to vector<1x16x4xf32>
    %4 = arith.mulf %0, %3 : vector<1x16x4xf32>
    %c0_4 = arith.constant 0 : index
    %c0_5 = arith.constant 0 : index
    %5 = vector.load %arg3[%c0_4, %c0_5] : memref<1x4xf32, #tpu.memory_space<vmem>>, vector<1x4xf32>
    %6 = vector.shape_cast %5 : vector<1x4xf32> to vector<1x1x4xf32>
    %7 = vector.broadcast %6 : vector<1x1x4xf32> to vector<1x16x4xf32>
    %8 = arith.addf %4, %7 : vector<1x16x4xf32>
    %cst = arith.constant 0.000000e+00 : f32
    %9 = vector.broadcast %cst : f32 to vector<1x2x4xf32>
    %10 = tpu.concatenate %9, %8 in 1 : vector<1x2x4xf32>, vector<1x16x4xf32> -> vector<1x18x4xf32>
    %11 = vector.extract_strided_slice %10 {offsets = [0, 0, 0], sizes = [1, 16, 4], strides = [1, 1, 1]} : vector<1x18x4xf32> to vector<1x16x4xf32>
    %12 = vector.extract_strided_slice %10 {offsets = [0, 1, 0], sizes = [1, 16, 4], strides = [1, 1, 1]} : vector<1x18x4xf32> to vector<1x16x4xf32>
    %13 = vector.extract_strided_slice %10 {offsets = [0, 2, 0], sizes = [1, 16, 4], strides = [1, 1, 1]} : vector<1x18x4xf32> to vector<1x16x4xf32>
    %14 = tpu.concatenate %11, %12, %13 in 2 : vector<1x16x4xf32>, vector<1x16x4xf32>, vector<1x16x4xf32> -> vector<1x16x12xf32>
    %15 = vector.shape_cast %14 : vector<1x16x12xf32> to vector<16x12xf32>
    %16 = arith.truncf %15 : vector<16x12xf32> to vector<16x12xbf16>
    %c0_6 = arith.constant 0 : index
    %c0_7 = arith.constant 0 : index
    %17 = vector.load %arg4[%c0_6, %c0_7] : memref<12x8xbf16, #tpu.memory_space<vmem>>, vector<12x8xbf16>
    %cst_8 = arith.constant dense<0.000000e+00> : vector<16x8xf32>
    %18 = tpu.matmul %16, %17, %cst_8 {dimension_numbers = #tpu.dot_dimension_numbers<[1], [0], [0], [1], [0, 0, 1, 1], [], []>} : vector<16x12xbf16>, vector<12x8xbf16>, vector<16x8xf32> -> vector<16x8xf32>
    %c0_9 = arith.constant 0 : index
    %c0_10 = arith.constant 0 : index
    %19 = vector.load %arg5[%c0_9, %c0_10] : memref<1x8xf32, #tpu.memory_space<vmem>>, vector<1x8xf32>
    %20 = vector.broadcast %19 : vector<1x8xf32> to vector<16x8xf32>
    %21 = arith.mulf %18, %20 : vector<16x8xf32>
    %c0_11 = arith.constant 0 : index
    %c0_12 = arith.constant 0 : index
    %22 = vector.load %arg6[%c0_11, %c0_12] : memref<1x8xf32, #tpu.memory_space<vmem>>, vector<1x8xf32>
    %23 = vector.broadcast %22 : vector<1x8xf32> to vector<16x8xf32>
    %24 = arith.addf %21, %23 : vector<16x8xf32>
    %cst_13 = arith.constant 0.000000e+00 : f32
    %25 = vector.broadcast %cst_13 : f32 to vector<16x8xf32>
    %26 = arith.maximumf %24, %25 : vector<16x8xf32>
    %27 = vector.shape_cast %8 : vector<1x16x4xf32> to vector<16x4xf32>
    %28 = arith.truncf %27 : vector<16x4xf32> to vector<16x4xbf16>
    %c0_14 = arith.constant 0 : index
    %c0_15 = arith.constant 0 : index
    %29 = vector.load %arg7[%c0_14, %c0_15] : memref<4x8xbf16, #tpu.memory_space<vmem>>, vector<4x8xbf16>
    %cst_16 = arith.constant dense<0.000000e+00> : vector<16x8xf32>
    %30 = tpu.matmul %28, %29, %cst_16 {dimension_numbers = #tpu.dot_dimension_numbers<[1], [0], [0], [1], [0, 0, 1, 1], [], []>} : vector<16x4xbf16>, vector<4x8xbf16>, vector<16x8xf32> -> vector<16x8xf32>
    %c0_17 = arith.constant 0 : index
    %c0_18 = arith.constant 0 : index
    %31 = vector.load %arg8[%c0_17, %c0_18] : memref<1x8xf32, #tpu.memory_space<vmem>>, vector<1x8xf32>
    %32 = vector.broadcast %31 : vector<1x8xf32> to vector<16x8xf32>
    %33 = arith.addf %30, %32 : vector<16x8xf32>
    %34 = arith.addf %26, %33 : vector<16x8xf32>
    %35 = vector.shape_cast %34 : vector<16x8xf32> to vector<1x16x8xf32>
    %cst_19 = arith.constant 0.000000e+00 : f32
    %36 = vector.broadcast %cst_19 : f32 to vector<1x4x8xf32>
    %37 = tpu.concatenate %36, %35 in 1 : vector<1x4x8xf32>, vector<1x16x8xf32> -> vector<1x20x8xf32>
    %38 = vector.extract_strided_slice %37 {offsets = [0, 0, 0], sizes = [1, 16, 8], strides = [1, 1, 1]} : vector<1x20x8xf32> to vector<1x16x8xf32>
    %39 = vector.extract_strided_slice %37 {offsets = [0, 2, 0], sizes = [1, 16, 8], strides = [1, 1, 1]} : vector<1x20x8xf32> to vector<1x16x8xf32>
    %40 = vector.extract_strided_slice %37 {offsets = [0, 4, 0], sizes = [1, 16, 8], strides = [1, 1, 1]} : vector<1x20x8xf32> to vector<1x16x8xf32>
    %41 = tpu.concatenate %38, %39, %40 in 2 : vector<1x16x8xf32>, vector<1x16x8xf32>, vector<1x16x8xf32> -> vector<1x16x24xf32>
    %42 = vector.shape_cast %41 : vector<1x16x24xf32> to vector<16x24xf32>
    %43 = arith.truncf %42 : vector<16x24xf32> to vector<16x24xbf16>
    %c0_20 = arith.constant 0 : index
    %c0_21 = arith.constant 0 : index
    %44 = vector.load %arg9[%c0_20, %c0_21] : memref<24x16xbf16, #tpu.memory_space<vmem>>, vector<24x16xbf16>
    %cst_22 = arith.constant dense<0.000000e+00> : vector<16x16xf32>
    %45 = tpu.matmul %43, %44, %cst_22 {dimension_numbers = #tpu.dot_dimension_numbers<[1], [0], [0], [1], [0, 0, 1, 1], [], []>} : vector<16x24xbf16>, vector<24x16xbf16>, vector<16x16xf32> -> vector<16x16xf32>
    %c0_23 = arith.constant 0 : index
    %c0_24 = arith.constant 0 : index
    %46 = vector.load %arg10[%c0_23, %c0_24] : memref<1x16xf32, #tpu.memory_space<vmem>>, vector<1x16xf32>
    %47 = vector.broadcast %46 : vector<1x16xf32> to vector<16x16xf32>
    %48 = arith.mulf %45, %47 : vector<16x16xf32>
    %c0_25 = arith.constant 0 : index
    %c0_26 = arith.constant 0 : index
    %49 = vector.load %arg11[%c0_25, %c0_26] : memref<1x16xf32, #tpu.memory_space<vmem>>, vector<1x16xf32>
    %50 = vector.broadcast %49 : vector<1x16xf32> to vector<16x16xf32>
    %51 = arith.addf %48, %50 : vector<16x16xf32>
    %cst_27 = arith.constant 0.000000e+00 : f32
    %52 = vector.broadcast %cst_27 : f32 to vector<16x16xf32>
    %53 = arith.maximumf %51, %52 : vector<16x16xf32>
    %54 = vector.shape_cast %35 : vector<1x16x8xf32> to vector<16x8xf32>
    %55 = arith.truncf %54 : vector<16x8xf32> to vector<16x8xbf16>
    %c0_28 = arith.constant 0 : index
    %c0_29 = arith.constant 0 : index
    %56 = vector.load %arg12[%c0_28, %c0_29] : memref<8x16xbf16, #tpu.memory_space<vmem>>, vector<8x16xbf16>
    %cst_30 = arith.constant dense<0.000000e+00> : vector<16x16xf32>
    %57 = tpu.matmul %55, %56, %cst_30 {dimension_numbers = #tpu.dot_dimension_numbers<[1], [0], [0], [1], [0, 0, 1, 1], [], []>} : vector<16x8xbf16>, vector<8x16xbf16>, vector<16x16xf32> -> vector<16x16xf32>
    %c0_31 = arith.constant 0 : index
    %c0_32 = arith.constant 0 : index
    %58 = vector.load %arg13[%c0_31, %c0_32] : memref<1x16xf32, #tpu.memory_space<vmem>>, vector<1x16xf32>
    %59 = vector.broadcast %58 : vector<1x16xf32> to vector<16x16xf32>
    %60 = arith.addf %57, %59 : vector<16x16xf32>
    %61 = arith.addf %53, %60 : vector<16x16xf32>
    %62 = vector.shape_cast %61 : vector<16x16xf32> to vector<1x16x16xf32>
    %cst_33 = arith.constant 0.000000e+00 : f32
    %63 = vector.broadcast %cst_33 : f32 to vector<1x8x16xf32>
    %64 = tpu.concatenate %63, %62 in 1 : vector<1x8x16xf32>, vector<1x16x16xf32> -> vector<1x24x16xf32>
    %65 = vector.extract_strided_slice %64 {offsets = [0, 0, 0], sizes = [1, 16, 16], strides = [1, 1, 1]} : vector<1x24x16xf32> to vector<1x16x16xf32>
    %66 = vector.extract_strided_slice %64 {offsets = [0, 4, 0], sizes = [1, 16, 16], strides = [1, 1, 1]} : vector<1x24x16xf32> to vector<1x16x16xf32>
    %67 = vector.extract_strided_slice %64 {offsets = [0, 8, 0], sizes = [1, 16, 16], strides = [1, 1, 1]} : vector<1x24x16xf32> to vector<1x16x16xf32>
    %68 = tpu.concatenate %65, %66, %67 in 2 : vector<1x16x16xf32>, vector<1x16x16xf32>, vector<1x16x16xf32> -> vector<1x16x48xf32>
    %69 = vector.shape_cast %68 : vector<1x16x48xf32> to vector<16x48xf32>
    %70 = arith.truncf %69 : vector<16x48xf32> to vector<16x48xbf16>
    %c0_34 = arith.constant 0 : index
    %c0_35 = arith.constant 0 : index
    %71 = vector.load %arg14[%c0_34, %c0_35] : memref<48x16xbf16, #tpu.memory_space<vmem>>, vector<48x16xbf16>
    %cst_36 = arith.constant dense<0.000000e+00> : vector<16x16xf32>
    %72 = tpu.matmul %70, %71, %cst_36 {dimension_numbers = #tpu.dot_dimension_numbers<[1], [0], [0], [1], [0, 0, 1, 1], [], []>} : vector<16x48xbf16>, vector<48x16xbf16>, vector<16x16xf32> -> vector<16x16xf32>
    %c0_37 = arith.constant 0 : index
    %c0_38 = arith.constant 0 : index
    %73 = vector.load %arg15[%c0_37, %c0_38] : memref<1x16xf32, #tpu.memory_space<vmem>>, vector<1x16xf32>
    %74 = vector.broadcast %73 : vector<1x16xf32> to vector<16x16xf32>
    %75 = arith.mulf %72, %74 : vector<16x16xf32>
    %c0_39 = arith.constant 0 : index
    %c0_40 = arith.constant 0 : index
    %76 = vector.load %arg16[%c0_39, %c0_40] : memref<1x16xf32, #tpu.memory_space<vmem>>, vector<1x16xf32>
    %77 = vector.broadcast %76 : vector<1x16xf32> to vector<16x16xf32>
    %78 = arith.addf %75, %77 : vector<16x16xf32>
    %cst_41 = arith.constant 0.000000e+00 : f32
    %79 = vector.broadcast %cst_41 : f32 to vector<16x16xf32>
    %80 = arith.maximumf %78, %79 : vector<16x16xf32>
    %81 = vector.shape_cast %62 : vector<1x16x16xf32> to vector<16x16xf32>
    %82 = arith.addf %80, %81 : vector<16x16xf32>
    %83 = vector.shape_cast %82 : vector<16x16xf32> to vector<1x16x16xf32>
    %cst_42 = arith.constant dense<0.000000e+00> : vector<1x16xf32>
    %84 = vector.multi_reduction <add>, %83, %cst_42 [1] : vector<1x16x16xf32> to vector<1x16xf32>
    %cst_43 = arith.constant 1.600000e+01 : f32
    %85 = vector.broadcast %cst_43 : f32 to vector<1x16xf32>
    %86 = arith.divf %84, %85 : vector<1x16xf32>
    %c0_44 = arith.constant 0 : index
    %c0_45 = arith.constant 0 : index
    %87 = vector.load %arg17[%c0_44, %c0_45] : memref<16x5xf32, #tpu.memory_space<vmem>>, vector<16x5xf32>
    %cst_46 = arith.constant dense<0.000000e+00> : vector<1x5xf32>
    %88 = tpu.matmul %86, %87, %cst_46 {dimension_numbers = #tpu.dot_dimension_numbers<[1], [0], [0], [1], [0, 0, 1, 1], [], []>} : vector<1x16xf32>, vector<16x5xf32>, vector<1x5xf32> -> vector<1x5xf32>
    %c0_47 = arith.constant 0 : index
    %c0_48 = arith.constant 0 : index
    %89 = vector.load %arg18[%c0_47, %c0_48] : memref<1x5xf32, #tpu.memory_space<vmem>>, vector<1x5xf32>
    %90 = arith.addf %88, %89 : vector<1x5xf32>
    %91 = vector.shape_cast %90 : vector<1x5xf32> to vector<1x1x5xf32>
    %c0_49 = arith.constant 0 : index
    %c0_50 = arith.constant 0 : index
    %c0_51 = arith.constant 0 : index
    %92 = vector.load %arg19[%c0_49, %c0_50, %c0_51] : memref<1x1x5xf32, #tpu.memory_space<vmem>>, vector<1x1x5xf32>
    tpu.vector_store %arg19[%c0_49, %c0_50, %c0_51], %91 {strides = array<i32>} : memref<1x1x5xf32, #tpu.memory_space<vmem>>, vector<1x1x5xf32>,
    return
  }
  func.func @transform_0(%arg0: i32) -> (i32, i32, i32) {
    %c0_i32 = arith.constant 0 : i32
    %c0_i32_0 = arith.constant 0 : i32
    %c0_i32_1 = arith.constant 0 : i32
    return %arg0, %c0_i32, %c0_i32_0 : i32, i32, i32
  }
  func.func @transform_1(%arg0: i32) -> (i32, i32) {
    %c0_i32 = arith.constant 0 : i32
    %c0_i32_0 = arith.constant 0 : i32
    %c0_i32_1 = arith.constant 0 : i32
    return %c0_i32, %c0_i32_0 : i32, i32
  }
  func.func @transform_2(%arg0: i32) -> (i32, i32) {
    %c0_i32 = arith.constant 0 : i32
    %c0_i32_0 = arith.constant 0 : i32
    %c0_i32_1 = arith.constant 0 : i32
    return %c0_i32, %c0_i32_0 : i32, i32
  }
  func.func @transform_3(%arg0: i32) -> (i32, i32) {
    %c0_i32 = arith.constant 0 : i32
    %c0_i32_0 = arith.constant 0 : i32
    %c0_i32_1 = arith.constant 0 : i32
    return %c0_i32, %c0_i32_0 : i32, i32
  }
  func.func @transform_4(%arg0: i32) -> (i32, i32) {
    %c0_i32 = arith.constant 0 : i32
    %c0_i32_0 = arith.constant 0 : i32
    %c0_i32_1 = arith.constant 0 : i32
    return %c0_i32, %c0_i32_0 : i32, i32
  }
  func.func @transform_5(%arg0: i32) -> (i32, i32) {
    %c0_i32 = arith.constant 0 : i32
    %c0_i32_0 = arith.constant 0 : i32
    %c0_i32_1 = arith.constant 0 : i32
    return %c0_i32, %c0_i32_0 : i32, i32
  }
  func.func @transform_6(%arg0: i32) -> (i32, i32) {
    %c0_i32 = arith.constant 0 : i32
    %c0_i32_0 = arith.constant 0 : i32
    %c0_i32_1 = arith.constant 0 : i32
    return %c0_i32, %c0_i32_0 : i32, i32
  }
  func.func @transform_7(%arg0: i32) -> (i32, i32) {
    %c0_i32 = arith.constant 0 : i32
    %c0_i32_0 = arith.constant 0 : i32
    %c0_i32_1 = arith.constant 0 : i32
    return %c0_i32, %c0_i32_0 : i32, i32
  }
  func.func @transform_8(%arg0: i32) -> (i32, i32) {
    %c0_i32 = arith.constant 0 : i32
    %c0_i32_0 = arith.constant 0 : i32
    %c0_i32_1 = arith.constant 0 : i32
    return %c0_i32, %c0_i32_0 : i32, i32
  }
  func.func @transform_9(%arg0: i32) -> (i32, i32) {
    %c0_i32 = arith.constant 0 : i32
    %c0_i32_0 = arith.constant 0 : i32
    %c0_i32_1 = arith.constant 0 : i32
    return %c0_i32, %c0_i32_0 : i32, i32
  }
  func.func @transform_10(%arg0: i32) -> (i32, i32) {
    %c0_i32 = arith.constant 0 : i32
    %c0_i32_0 = arith.constant 0 : i32
    %c0_i32_1 = arith.constant 0 : i32
    return %c0_i32, %c0_i32_0 : i32, i32
  }
  func.func @transform_11(%arg0: i32) -> (i32, i32) {
    %c0_i32 = arith.constant 0 : i32
    %c0_i32_0 = arith.constant 0 : i32
    %c0_i32_1 = arith.constant 0 : i32
    return %c0_i32, %c0_i32_0 : i32, i32
  }
  func.func @transform_12(%arg0: i32) -> (i32, i32) {
    %c0_i32 = arith.constant 0 : i32
    %c0_i32_0 = arith.constant 0 : i32
    %c0_i32_1 = arith.constant 0 : i32
    return %c0_i32, %c0_i32_0 : i32, i32
  }
  func.func @transform_13(%arg0: i32) -> (i32, i32) {
    %c0_i32 = arith.constant 0 : i32
    %c0_i32_0 = arith.constant 0 : i32
    %c0_i32_1 = arith.constant 0 : i32
    return %c0_i32, %c0_i32_0 : i32, i32
  }
  func.func @transform_14(%arg0: i32) -> (i32, i32) {
    %c0_i32 = arith.constant 0 : i32
    %c0_i32_0 = arith.constant 0 : i32
    %c0_i32_1 = arith.constant 0 : i32
    return %c0_i32, %c0_i32_0 : i32, i32
  }
  func.func @transform_15(%arg0: i32) -> (i32, i32) {
    %c0_i32 = arith.constant 0 : i32
    %c0_i32_0 = arith.constant 0 : i32
    %c0_i32_1 = arith.constant 0 : i32
    return %c0_i32, %c0_i32_0 : i32, i32
  }
  func.func @transform_16(%arg0: i32) -> (i32, i32) {
    %c0_i32 = arith.constant 0 : i32
    %c0_i32_0 = arith.constant 0 : i32
    %c0_i32_1 = arith.constant 0 : i32
    return %c0_i32, %c0_i32_0 : i32, i32
  }
  func.func @transform_17(%arg0: i32) -> (i32, i32) {
    %c0_i32 = arith.constant 0 : i32
    %c0_i32_0 = arith.constant 0 : i32
    %c0_i32_1 = arith.constant 0 : i32
    return %c0_i32, %c0_i32_0 : i32, i32
  }
  func.func @transform_18(%arg0: i32) -> (i32, i32, i32) {
    %c0_i32 = arith.constant 0 : i32
    %c0_i32_0 = arith.constant 0 : i32
    %c0_i32_1 = arith.constant 0 : i32
    return %arg0, %c0_i32, %c0_i32_0 : i32, i32, i32
  }
}

</mosaic_0001>

<llo_original>
// kernel: tpu_custom_call.1
$region0: #{tpu_custom_call.1}
  #allocation0 [shape = 'u32[]', space=smem, size = 0x4, offset = 0x4, fixed_abs, tag = 'smem constant byte address 0x4 - core index']
  #allocation1 [shape = 'u32[72,128]{1,0:T(1,128)}', space=vmem, size = 0x9000, scoped, tag = 'internal scratch']
  %s0 = inlined_call_operand.vmem [shape: f32[2,16,4], index: 0, kind: input, shape index: {}]
  %s1 = inlined_call_operand.vmem [shape: f32[1,4], index: 1, kind: input, shape index: {}]
  %s2 = inlined_call_operand.vmem [shape: f32[1,4], index: 2, kind: input, shape index: {}]
  %s3 = inlined_call_operand.vmem [shape: bf16[12,8], index: 3, kind: input, shape index: {}]
  %s4 = inlined_call_operand.vmem [shape: f32[1,8], index: 4, kind: input, shape index: {}]
  %s5 = inlined_call_operand.vmem [shape: f32[1,8], index: 5, kind: input, shape index: {}]
  %s6 = inlined_call_operand.vmem [shape: bf16[4,8], index: 6, kind: input, shape index: {}]
  %s7 = inlined_call_operand.vmem [shape: f32[1,8], index: 7, kind: input, shape index: {}]
  %s8 = inlined_call_operand.vmem [shape: bf16[24,16], index: 8, kind: input, shape index: {}]
  %s9 = inlined_call_operand.vmem [shape: f32[1,16], index: 9, kind: input, shape index: {}]
  %s10 = inlined_call_operand.vmem [shape: f32[1,16], index: 10, kind: input, shape index: {}]
  %s11 = inlined_call_operand.vmem [shape: bf16[8,16], index: 11, kind: input, shape index: {}]
  %s12 = inlined_call_operand.vmem [shape: f32[1,16], index: 12, kind: input, shape index: {}]
  %s13 = inlined_call_operand.vmem [shape: bf16[48,16], index: 13, kind: input, shape index: {}]
  %s14 = inlined_call_operand.vmem [shape: f32[1,16], index: 14, kind: input, shape index: {}]
  %s15 = inlined_call_operand.vmem [shape: f32[1,16], index: 15, kind: input, shape index: {}]
  %s16 = inlined_call_operand.vmem [shape: f32[16,5], index: 16, kind: input, shape index: {}]
  %s17 = inlined_call_operand.vmem [shape: f32[1,5], index: 17, kind: input, shape index: {}]
  %s18 = inlined_call_operand.hbm [shape: f32[2,1,5], index: 18, kind: output, shape index: {}]
  %s19 = sld [smem:[#allocation0]]
  $region105: #{tpu_custom_call.1} parent=0
    _
  %s21 = ssub.s32 1, %s19
  %s22 = scalar_select 0, %s21, %s19
  $region1: #{tpu_custom_call.1} parent=0
    #allocation2 [shape = 'u8[1024]{0}', space=vmem, size = 0x400, scoped, tag = 'output window, operand 0']
    #allocation3 [shape = 's32[2]{0}', space=sflag, size = 0x8, scoped, tag = 'scoped memory for tpu_custom_call.1']
    %23 = vsyncpa [#allocation3], 0
    %s24 = scalar_lea.sflag [#allocation3], 1
    %25 = vsyncpa %s24, 0
    loop: start=0, step=1, limit=4
    $region2: #{tpu_custom_call.1} parent=1 // loop_pre_header
      _
    $region3: #{tpu_custom_call.1} parent=1 // loop_header
      %s27 = sphi 0, %s31
      %p28 = scmp.ge.s32.totalorder %s27, 4
      %s37 = sphi 0, %s39
      %s40 = sphi 0, %s37
      %s41 = sphi 0, %s40
      %s57 = sphi 0, %s41
      %s61 = sphi 0, %s61
      %s63 = sphi 0, %s61
      %s64 = sphi 0, %s63
      %s78 = sphi 0, %s64
      %s82 = sphi 0, %s82
      %s84 = sphi 0, %s82
      %s85 = sphi 0, %s84
      %s99 = sphi 0, %s85
      %s103 = sphi 0, %s103
      %s105 = sphi 0, %s103
      %s106 = sphi 0, %s105
      %s120 = sphi 0, %s106
      %s124 = sphi 0, %s124
      %s126 = sphi 0, %s124
      %s127 = sphi 0, %s126
      %s141 = sphi 0, %s127
      %s145 = sphi 0, %s145
      %s147 = sphi 0, %s145
      %s148 = sphi 0, %s147
      %s162 = sphi 0, %s148
      %s166 = sphi 0, %s166
      %s168 = sphi 0, %s166
      %s169 = sphi 0, %s168
      %s183 = sphi 0, %s169
      %s187 = sphi 0, %s187
      %s189 = sphi 0, %s187
      %s190 = sphi 0, %s189
      %s204 = sphi 0, %s190
      %s208 = sphi 0, %s208
      %s210 = sphi 0, %s208
      %s211 = sphi 0, %s210
      %s225 = sphi 0, %s211
      %s229 = sphi 0, %s229
      %s231 = sphi 0, %s229
      %s232 = sphi 0, %s231
      %s246 = sphi 0, %s232
      %s250 = sphi 0, %s250
      %s252 = sphi 0, %s250
      %s253 = sphi 0, %s252
      %s267 = sphi 0, %s253
      %s271 = sphi 0, %s271
      %s273 = sphi 0, %s271
      %s274 = sphi 0, %s273
      %s288 = sphi 0, %s274
      %s292 = sphi 0, %s292
      %s294 = sphi 0, %s292
      %s295 = sphi 0, %s294
      %s309 = sphi 0, %s295
      %s313 = sphi 0, %s313
      %s315 = sphi 0, %s313
      %s316 = sphi 0, %s315
      %s330 = sphi 0, %s316
      %s334 = sphi 0, %s334
      %s336 = sphi 0, %s334
      %s337 = sphi 0, %s336
      %s351 = sphi 0, %s337
      %s355 = sphi 0, %s355
      %s357 = sphi 0, %s355
      %s358 = sphi 0, %s357
      %s372 = sphi 0, %s358
      %s376 = sphi 0, %s376
      %s378 = sphi 0, %s376
      %s379 = sphi 0, %s378
      %s393 = sphi 0, %s379
      %s397 = sphi 0, %s397
      %s399 = sphi 0, %s397
      %s400 = sphi 0, %s399
      %s414 = sphi 0, %s400
      %s420 = sphi 0, %s422
      %s423 = sphi 0, %s420
      %s424 = sphi 0, %s423
      %s440 = sphi 0, %s424
    $region4: #{tpu_custom_call.1} parent=1 // loop_header_branch
      %30 = sbr.rel (%p28) target = $region8
    $region5: #{tpu_custom_call.1} parent=1 // loop_body
      %s32 = ssub.s32 %s27, 1
      %s33 = ssub.s32 %s27, 2
      %s34 = sadd.s32 %s27, 1
      %s35 = ssub.s32 %s27, %s34
      %p36 = scmp.eq.s32.totalorder %s35, 0
      %s38 = sadd.s32 %s37, 1
      %s39 = scalar_select %p36, %s37, %s38
      %p42 = pneg %p36
      %p43 = scmp.eq.s32.totalorder %s27, 1
      %p44 = por %p42, %p43
      %p45 = scmp.ne.s32.totalorder %s37, %s40
      %p46 = scmp.eq.s32.totalorder %s27, 0
      %p47 = por %p45, %p46
      %p48 = scmp.ne.s32.totalorder %s37, %s40
      %p49 = scmp.eq.s32.totalorder %s32, 1
      %p50 = por %p48, %p49
      %p51 = scmp.ne.s32.totalorder %s40, %s41
      %p52 = scmp.eq.s32.totalorder %s32, 0
      %p53 = por %p51, %p52
      %p54 = scmp.ne.s32.totalorder %s40, %s41
      %p55 = scmp.eq.s32.totalorder %s33, 1
      %p56 = por %p54, %p55
      %p58 = scmp.ne.s32.totalorder %s41, %s57
      %p59 = scmp.eq.s32.totalorder %s33, 0
      %p60 = por %p58, %p59
      %s62 = sadd.s32 %s61, 1
      %p65 = scmp.eq.s32.totalorder %s27, 1
      %p66 = scmp.ne.s32.totalorder %s61, %s63
      %p67 = scmp.eq.s32.totalorder %s27, 0
      %p68 = por %p66, %p67
      %p69 = scmp.ne.s32.totalorder %s61, %s63
      %p70 = scmp.eq.s32.totalorder %s32, 1
      %p71 = por %p69, %p70
      %p72 = scmp.ne.s32.totalorder %s63, %s64
      %p73 = scmp.eq.s32.totalorder %s32, 0
      %p74 = por %p72, %p73
      %p75 = scmp.ne.s32.totalorder %s63, %s64
      %p76 = scmp.eq.s32.totalorder %s33, 1
      %p77 = por %p75, %p76
      %p79 = scmp.ne.s32.totalorder %s64, %s78
      %p80 = scmp.eq.s32.totalorder %s33, 0
      %p81 = por %p79, %p80
      %s83 = sadd.s32 %s82, 1
      %p86 = scmp.eq.s32.totalorder %s27, 1
      %p87 = scmp.ne.s32.totalorder %s82, %s84
      %p88 = scmp.eq.s32.totalorder %s27, 0
      %p89 = por %p87, %p88
      %p90 = scmp.ne.s32.totalorder %s82, %s84
      %p91 = scmp.eq.s32.totalorder %s32, 1
      %p92 = por %p90, %p91
      %p93 = scmp.ne.s32.totalorder %s84, %s85
      %p94 = scmp.eq.s32.totalorder %s32, 0
      %p95 = por %p93, %p94
      %p96 = scmp.ne.s32.totalorder %s84, %s85
      %p97 = scmp.eq.s32.totalorder %s33, 1
      %p98 = por %p96, %p97
      %p100 = scmp.ne.s32.totalorder %s85, %s99
      %p101 = scmp.eq.s32.totalorder %s33, 0
      %p102 = por %p100, %p101
      %s104 = sadd.s32 %s103, 1
      %p107 = scmp.eq.s32.totalorder %s27, 1
      %p108 = scmp.ne.s32.totalorder %s103, %s105
      %p109 = scmp.eq.s32.totalorder %s27, 0
      %p110 = por %p108, %p109
      %p111 = scmp.ne.s32.totalorder %s103, %s105
      %p112 = scmp.eq.s32.totalorder %s32, 1
      %p113 = por %p111, %p112
      %p114 = scmp.ne.s32.totalorder %s105, %s106
      %p115 = scmp.eq.s32.totalorder %s32, 0
      %p116 = por %p114, %p115
      %p117 = scmp.ne.s32.totalorder %s105, %s106
      %p118 = scmp.eq.s32.totalorder %s33, 1
      %p119 = por %p117, %p118
      %p121 = scmp.ne.s32.totalorder %s106, %s120
      %p122 = scmp.eq.s32.totalorder %s33, 0
      %p123 = por %p121, %p122
      %s125 = sadd.s32 %s124, 1
      %p128 = scmp.eq.s32.totalorder %s27, 1
      %p129 = scmp.ne.s32.totalorder %s124, %s126
      %p130 = scmp.eq.s32.totalorder %s27, 0
      %p131 = por %p129, %p130
      %p132 = scmp.ne.s32.totalorder %s124, %s126
      %p133 = scmp.eq.s32.totalorder %s32, 1
      %p134 = por %p132, %p133
      %p135 = scmp.ne.s32.totalorder %s126, %s127
      %p136 = scmp.eq.s32.totalorder %s32, 0
      %p137 = por %p135, %p136
      %p138 = scmp.ne.s32.totalorder %s126, %s127
      %p139 = scmp.eq.s32.totalorder %s33, 1
      %p140 = por %p138, %p139
      %p142 = scmp.ne.s32.totalorder %s127, %s141
      %p143 = scmp.eq.s32.totalorder %s33, 0
      %p144 = por %p142, %p143
      %s146 = sadd.s32 %s145, 1
      %p149 = scmp.eq.s32.totalorder %s27, 1
      %p150 = scmp.ne.s32.totalorder %s145, %s147
      %p151 = scmp.eq.s32.totalorder %s27, 0
      %p152 = por %p150, %p151
      %p153 = scmp.ne.s32.totalorder %s145, %s147
      %p154 = scmp.eq.s32.totalorder %s32, 1
      %p155 = por %p153, %p154
      %p156 = scmp.ne.s32.totalorder %s147, %s148
      %p157 = scmp.eq.s32.totalorder %s32, 0
      %p158 = por %p156, %p157
      %p159 = scmp.ne.s32.totalorder %s147, %s148
      %p160 = scmp.eq.s32.totalorder %s33, 1
      %p161 = por %p159, %p160
      %p163 = scmp.ne.s32.totalorder %s148, %s162
      %p164 = scmp.eq.s32.totalorder %s33, 0
      %p165 = por %p163, %p164
      %s167 = sadd.s32 %s166, 1
      %p170 = scmp.eq.s32.totalorder %s27, 1
      %p171 = scmp.ne.s32.totalorder %s166, %s168
      %p172 = scmp.eq.s32.totalorder %s27, 0
      %p173 = por %p171, %p172
      %p174 = scmp.ne.s32.totalorder %s166, %s168
      %p175 = scmp.eq.s32.totalorder %s32, 1
      %p176 = por %p174, %p175
      %p177 = scmp.ne.s32.totalorder %s168, %s169
      %p178 = scmp.eq.s32.totalorder %s32, 0
      %p179 = por %p177, %p178
      %p180 = scmp.ne.s32.totalorder %s168, %s169
      %p181 = scmp.eq.s32.totalorder %s33, 1
      %p182 = por %p180, %p181
      %p184 = scmp.ne.s32.totalorder %s169, %s183
      %p185 = scmp.eq.s32.totalorder %s33, 0
      %p186 = por %p184, %p185
      %s188 = sadd.s32 %s187, 1
      %p191 = scmp.eq.s32.totalorder %s27, 1
      %p192 = scmp.ne.s32.totalorder %s187, %s189
      %p193 = scmp.eq.s32.totalorder %s27, 0
      %p194 = por %p192, %p193
      %p195 = scmp.ne.s32.totalorder %s187, %s189
      %p196 = scmp.eq.s32.totalorder %s32, 1
      %p197 = por %p195, %p196
      %p198 = scmp.ne.s32.totalorder %s189, %s190
      %p199 = scmp.eq.s32.totalorder %s32, 0
      %p200 = por %p198, %p199
      %p201 = scmp.ne.s32.totalorder %s189, %s190
      %p202 = scmp.eq.s32.totalorder %s33, 1
      %p203 = por %p201, %p202
      %p205 = scmp.ne.s32.totalorder %s190, %s204
      %p206 = scmp.eq.s32.totalorder %s33, 0
      %p207 = por %p205, %p206
      %s209 = sadd.s32 %s208, 1
      %p212 = scmp.eq.s32.totalorder %s27, 1
      %p213 = scmp.ne.s32.totalorder %s208, %s210
      %p214 = scmp.eq.s32.totalorder %s27, 0
      %p215 = por %p213, %p214
      %p216 = scmp.ne.s32.totalorder %s208, %s210
      %p217 = scmp.eq.s32.totalorder %s32, 1
      %p218 = por %p216, %p217
      %p219 = scmp.ne.s32.totalorder %s210, %s211
      %p220 = scmp.eq.s32.totalorder %s32, 0
      %p221 = por %p219, %p220
      %p222 = scmp.ne.s32.totalorder %s210, %s211
      %p223 = scmp.eq.s32.totalorder %s33, 1
      %p224 = por %p222, %p223
      %p226 = scmp.ne.s32.totalorder %s211, %s225
      %p227 = scmp.eq.s32.totalorder %s33, 0
      %p228 = por %p226, %p227
      %s230 = sadd.s32 %s229, 1
      %p233 = scmp.eq.s32.totalorder %s27, 1
      %p234 = scmp.ne.s32.totalorder %s229, %s231
      %p235 = scmp.eq.s32.totalorder %s27, 0
      %p236 = por %p234, %p235
      %p237 = scmp.ne.s32.totalorder %s229, %s231
      %p238 = scmp.eq.s32.totalorder %s32, 1
      %p239 = por %p237, %p238
      %p240 = scmp.ne.s32.totalorder %s231, %s232
      %p241 = scmp.eq.s32.totalorder %s32, 0
      %p242 = por %p240, %p241
      %p243 = scmp.ne.s32.totalorder %s231, %s232
      %p244 = scmp.eq.s32.totalorder %s33, 1
      %p245 = por %p243, %p244
      %p247 = scmp.ne.s32.totalorder %s232, %s246
      %p248 = scmp.eq.s32.totalorder %s33, 0
      %p249 = por %p247, %p248
      %s251 = sadd.s32 %s250, 1
      %p254 = scmp.eq.s32.totalorder %s27, 1
      %p255 = scmp.ne.s32.totalorder %s250, %s252
      %p256 = scmp.eq.s32.totalorder %s27, 0
      %p257 = por %p255, %p256
      %p258 = scmp.ne.s32.totalorder %s250, %s252
      %p259 = scmp.eq.s32.totalorder %s32, 1
      %p260 = por %p258, %p259
      %p261 = scmp.ne.s32.totalorder %s252, %s253
      %p262 = scmp.eq.s32.totalorder %s32, 0
      %p263 = por %p261, %p262
      %p264 = scmp.ne.s32.totalorder %s252, %s253
      %p265 = scmp.eq.s32.totalorder %s33, 1
      %p266 = por %p264, %p265
      %p268 = scmp.ne.s32.totalorder %s253, %s267
      %p269 = scmp.eq.s32.totalorder %s33, 0
      %p270 = por %p268, %p269
      %s272 = sadd.s32 %s271, 1
      %p275 = scmp.eq.s32.totalorder %s27, 1
      %p276 = scmp.ne.s32.totalorder %s271, %s273
      %p277 = scmp.eq.s32.totalorder %s27, 0
      %p278 = por %p276, %p277
      %p279 = scmp.ne.s32.totalorder %s271, %s273
      %p280 = scmp.eq.s32.totalorder %s32, 1
      %p281 = por %p279, %p280
      %p282 = scmp.ne.s32.totalorder %s273, %s274
      %p283 = scmp.eq.s32.totalorder %s32, 0
      %p284 = por %p282, %p283
      %p285 = scmp.ne.s32.totalorder %s273, %s274
      %p286 = scmp.eq.s32.totalorder %s33, 1
      %p287 = por %p285, %p286
      %p289 = scmp.ne.s32.totalorder %s274, %s288
      %p290 = scmp.eq.s32.totalorder %s33, 0
      %p291 = por %p289, %p290
      %s293 = sadd.s32 %s292, 1
      %p296 = scmp.eq.s32.totalorder %s27, 1
      %p297 = scmp.ne.s32.totalorder %s292, %s294
      %p298 = scmp.eq.s32.totalorder %s27, 0
      %p299 = por %p297, %p298
      %p300 = scmp.ne.s32.totalorder %s292, %s294
      %p301 = scmp.eq.s32.totalorder %s32, 1
      %p302 = por %p300, %p301
      %p303 = scmp.ne.s32.totalorder %s294, %s295
      %p304 = scmp.eq.s32.totalorder %s32, 0
      %p305 = por %p303, %p304
      %p306 = scmp.ne.s32.totalorder %s294, %s295
      %p307 = scmp.eq.s32.totalorder %s33, 1
      %p308 = por %p306, %p307
      %p310 = scmp.ne.s32.totalorder %s295, %s309
      %p311 = scmp.eq.s32.totalorder %s33, 0
      %p312 = por %p310, %p311
      %s314 = sadd.s32 %s313, 1
      %p317 = scmp.eq.s32.totalorder %s27, 1
      %p318 = scmp.ne.s32.totalorder %s313, %s315
      %p319 = scmp.eq.s32.totalorder %s27, 0
      %p320 = por %p318, %p319
      %p321 = scmp.ne.s32.totalorder %s313, %s315
      %p322 = scmp.eq.s32.totalorder %s32, 1
      %p323 = por %p321, %p322
      %p324 = scmp.ne.s32.totalorder %s315, %s316
      %p325 = scmp.eq.s32.totalorder %s32, 0
      %p326 = por %p324, %p325
      %p327 = scmp.ne.s32.totalorder %s315, %s316
      %p328 = scmp.eq.s32.totalorder %s33, 1
      %p329 = por %p327, %p328
      %p331 = scmp.ne.s32.totalorder %s316, %s330
      %p332 = scmp.eq.s32.totalorder %s33, 0
      %p333 = por %p331, %p332
      %s335 = sadd.s32 %s334, 1
      %p338 = scmp.eq.s32.totalorder %s27, 1
      %p339 = scmp.ne.s32.totalorder %s334, %s336
      %p340 = scmp.eq.s32.totalorder %s27, 0
      %p341 = por %p339, %p340
      %p342 = scmp.ne.s32.totalorder %s334, %s336
      %p343 = scmp.eq.s32.totalorder %s32, 1
      %p344 = por %p342, %p343
      %p345 = scmp.ne.s32.totalorder %s336, %s337
      %p346 = scmp.eq.s32.totalorder %s32, 0
      %p347 = por %p345, %p346
      %p348 = scmp.ne.s32.totalorder %s336, %s337
      %p349 = scmp.eq.s32.totalorder %s33, 1
      %p350 = por %p348, %p349
      %p352 = scmp.ne.s32.totalorder %s337, %s351
      %p353 = scmp.eq.s32.totalorder %s33, 0
      %p354 = por %p352, %p353
      %s356 = sadd.s32 %s355, 1
      %p359 = scmp.eq.s32.totalorder %s27, 1
      %p360 = scmp.ne.s32.totalorder %s355, %s357
      %p361 = scmp.eq.s32.totalorder %s27, 0
      %p362 = por %p360, %p361
      %p363 = scmp.ne.s32.totalorder %s355, %s357
      %p364 = scmp.eq.s32.totalorder %s32, 1
      %p365 = por %p363, %p364
      %p366 = scmp.ne.s32.totalorder %s357, %s358
      %p367 = scmp.eq.s32.totalorder %s32, 0
      %p368 = por %p366, %p367
      %p369 = scmp.ne.s32.totalorder %s357, %s358
      %p370 = scmp.eq.s32.totalorder %s33, 1
      %p371 = por %p369, %p370
      %p373 = scmp.ne.s32.totalorder %s358, %s372
      %p374 = scmp.eq.s32.totalorder %s33, 0
      %p375 = por %p373, %p374
      %s377 = sadd.s32 %s376, 1
      %p380 = scmp.eq.s32.totalorder %s27, 1
      %p381 = scmp.ne.s32.totalorder %s376, %s378
      %p382 = scmp.eq.s32.totalorder %s27, 0
      %p383 = por %p381, %p382
      %p384 = scmp.ne.s32.totalorder %s376, %s378
      %p385 = scmp.eq.s32.totalorder %s32, 1
      %p386 = por %p384, %p385
      %p387 = scmp.ne.s32.totalorder %s378, %s379
      %p388 = scmp.eq.s32.totalorder %s32, 0
      %p389 = por %p387, %p388
      %p390 = scmp.ne.s32.totalorder %s378, %s379
      %p391 = scmp.eq.s32.totalorder %s33, 1
      %p392 = por %p390, %p391
      %p394 = scmp.ne.s32.totalorder %s379, %s393
      %p395 = scmp.eq.s32.totalorder %s33, 0
      %p396 = por %p394, %p395
      %s398 = sadd.s32 %s397, 1
      %p401 = scmp.eq.s32.totalorder %s27, 1
      %p402 = scmp.ne.s32.totalorder %s397, %s399
      %p403 = scmp.eq.s32.totalorder %s27, 0
      %p404 = por %p402, %p403
      %p405 = scmp.ne.s32.totalorder %s397, %s399
      %p406 = scmp.eq.s32.totalorder %s32, 1
      %p407 = por %p405, %p406
      %p408 = scmp.ne.s32.totalorder %s399, %s400
      %p409 = scmp.eq.s32.totalorder %s32, 0
      %p410 = por %p408, %p409
      %p411 = scmp.ne.s32.totalorder %s399, %s400
      %p412 = scmp.eq.s32.totalorder %s33, 1
      %p413 = por %p411, %p412
      %p415 = scmp.ne.s32.totalorder %s400, %s414
      %p416 = scmp.eq.s32.totalorder %s33, 0
      %p417 = por %p415, %p416
      %s418 = ssub.s32 %s27, %s34
      %p419 = scmp.eq.s32.totalorder %s418, 0
      %s421 = sadd.s32 %s420, 1
      %s422 = scalar_select %p419, %s420, %s421
      %p425 = pneg %p419
      %p426 = scmp.eq.s32.totalorder %s27, 1
      %p427 = por %p425, %p426
      %p428 = scmp.ne.s32.totalorder %s420, %s423
      %p429 = scmp.eq.s32.totalorder %s27, 0
      %p430 = por %p428, %p429
      %p431 = scmp.ne.s32.totalorder %s420, %s423
      %p432 = scmp.eq.s32.totalorder %s32, 1
      %p433 = por %p431, %p432
      %p434 = scmp.ne.s32.totalorder %s423, %s424
      %p435 = scmp.eq.s32.totalorder %s32, 0
      %p436 = por %p434, %p435
      %p437 = scmp.ne.s32.totalorder %s423, %s424
      %p438 = scmp.eq.s32.totalorder %s33, 1
      %p439 = por %p437, %p438
      %p441 = scmp.ne.s32.totalorder %s424, %s440
      %p442 = scmp.eq.s32.totalorder %s33, 0
      %p443 = por %p441, %p442
      %p444 = scmp.le.s32.totalorder 1, %s27
      %p445 = scmp.lt.s32.totalorder %s27, 3
      %p446 = pnand %p444, %p445
      %p447 = pneg %p446
      // Predicated region
      $region9: #{tpu_custom_call.1} parent=5 // pred_check
        _
      $region10: #{tpu_custom_call.1} parent=5 // pred_check_branch
        %449 = sbr.rel (%p446) target = $region12
      $region11: #{tpu_custom_call.1} parent=5 // pred_region
        %s450 = ssub.s32 %s27, 1
        // Predicated region
        $region13: #{tpu_custom_call.1} parent=11 // pred_check
          %p451 = pneg %p74
        $region14: #{tpu_custom_call.1} parent=11 // pred_check_branch
          %453 = sbr.rel (%p451) target = $region16
        $region15: #{tpu_custom_call.1} parent=11 // pred_region
          _
        $region16: #{tpu_custom_call.1} parent=11 // pred_fallthru
          _
        // Predicated region
        $region17: #{tpu_custom_call.1} parent=11 // pred_check
          %p454 = pneg %p95
        $region18: #{tpu_custom_call.1} parent=11 // pred_check_branch
          %456 = sbr.rel (%p454) target = $region20
        $region19: #{tpu_custom_call.1} parent=11 // pred_region
          _
        $region20: #{tpu_custom_call.1} parent=11 // pred_fallthru
          _
        // Predicated region
        $region21: #{tpu_custom_call.1} parent=11 // pred_check
          %p457 = pneg %p116
        $region22: #{tpu_custom_call.1} parent=11 // pred_check_branch
          %459 = sbr.rel (%p457) target = $region24
        $region23: #{tpu_custom_call.1} parent=11 // pred_region
          _
        $region24: #{tpu_custom_call.1} parent=11 // pred_fallthru
          _
        // Predicated region
        $region25: #{tpu_custom_call.1} parent=11 // pred_check
          %p460 = pneg %p137
        $region26: #{tpu_custom_call.1} parent=11 // pred_check_branch
          %462 = sbr.rel (%p460) target = $region28
        $region27: #{tpu_custom_call.1} parent=11 // pred_region
          _
        $region28: #{tpu_custom_call.1} parent=11 // pred_fallthru
          _
        // Predicated region
        $region29: #{tpu_custom_call.1} parent=11 // pred_check
          %p463 = pneg %p158
        $region30: #{tpu_custom_call.1} parent=11 // pred_check_branch
          %465 = sbr.rel (%p463) target = $region32
        $region31: #{tpu_custom_call.1} parent=11 // pred_region
          _
        $region32: #{tpu_custom_call.1} parent=11 // pred_fallthru
          _
        // Predicated region
        $region33: #{tpu_custom_call.1} parent=11 // pred_check
          %p466 = pneg %p179
        $region34: #{tpu_custom_call.1} parent=11 // pred_check_branch
          %468 = sbr.rel (%p466) target = $region36
        $region35: #{tpu_custom_call.1} parent=11 // pred_region
          _
        $region36: #{tpu_custom_call.1} parent=11 // pred_fallthru
          _
        // Predicated region
        $region37: #{tpu_custom_call.1} parent=11 // pred_check
          %p469 = pneg %p200
        $region38: #{tpu_custom_call.1} parent=11 // pred_check_branch
          %471 = sbr.rel (%p469) target = $region40
        $region39: #{tpu_custom_call.1} parent=11 // pred_region
          _
        $region40: #{tpu_custom_call.1} parent=11 // pred_fallthru
          _
        // Predicated region
        $region41: #{tpu_custom_call.1} parent=11 // pred_check
          %p472 = pneg %p221
        $region42: #{tpu_custom_call.1} parent=11 // pred_check_branch
          %474 = sbr.rel (%p472) target = $region44
        $region43: #{tpu_custom_call.1} parent=11 // pred_region
          _
        $region44: #{tpu_custom_call.1} parent=11 // pred_fallthru
          _
        // Predicated region
        $region45: #{tpu_custom_call.1} parent=11 // pred_check
          %p475 = pneg %p242
        $region46: #{tpu_custom_call.1} parent=11 // pred_check_branch
          %477 = sbr.rel (%p475) target = $region48
        $region47: #{tpu_custom_call.1} parent=11 // pred_region
          _
        $region48: #{tpu_custom_call.1} parent=11 // pred_fallthru
          _
        // Predicated region
        $region49: #{tpu_custom_call.1} parent=11 // pred_check
          %p478 = pneg %p263
        $region50: #{tpu_custom_call.1} parent=11 // pred_check_branch
          %480 = sbr.rel (%p478) target = $region52
        $region51: #{tpu_custom_call.1} parent=11 // pred_region
          _
        $region52: #{tpu_custom_call.1} parent=11 // pred_fallthru
          _
        // Predicated region
        $region53: #{tpu_custom_call.1} parent=11 // pred_check
          %p481 = pneg %p284
        $region54: #{tpu_custom_call.1} parent=11 // pred_check_branch
          %483 = sbr.rel (%p481) target = $region56
        $region55: #{tpu_custom_call.1} parent=11 // pred_region
          _
        $region56: #{tpu_custom_call.1} parent=11 // pred_fallthru
          _
        // Predicated region
        $region57: #{tpu_custom_call.1} parent=11 // pred_check
          %p484 = pneg %p305
        $region58: #{tpu_custom_call.1} parent=11 // pred_check_branch
          %486 = sbr.rel (%p484) target = $region60
        $region59: #{tpu_custom_call.1} parent=11 // pred_region
          _
        $region60: #{tpu_custom_call.1} parent=11 // pred_fallthru
          _
        // Predicated region
        $region61: #{tpu_custom_call.1} parent=11 // pred_check
          %p487 = pneg %p326
        $region62: #{tpu_custom_call.1} parent=11 // pred_check_branch
          %489 = sbr.rel (%p487) target = $region64
        $region63: #{tpu_custom_call.1} parent=11 // pred_region
          _
        $region64: #{tpu_custom_call.1} parent=11 // pred_fallthru
          _
        // Predicated region
        $region65: #{tpu_custom_call.1} parent=11 // pred_check
          %p490 = pneg %p347
        $region66: #{tpu_custom_call.1} parent=11 // pred_check_branch
          %492 = sbr.rel (%p490) target = $region68
        $region67: #{tpu_custom_call.1} parent=11 // pred_region
          _
        $region68: #{tpu_custom_call.1} parent=11 // pred_fallthru
          _
        // Predicated region
        $region69: #{tpu_custom_call.1} parent=11 // pred_check
          %p493 = pneg %p368
        $region70: #{tpu_custom_call.1} parent=11 // pred_check_branch
          %495 = sbr.rel (%p493) target = $region72
        $region71: #{tpu_custom_call.1} parent=11 // pred_region
          _
        $region72: #{tpu_custom_call.1} parent=11 // pred_fallthru
          _
        // Predicated region
        $region73: #{tpu_custom_call.1} parent=11 // pred_check
          %p496 = pneg %p389
        $region74: #{tpu_custom_call.1} parent=11 // pred_check_branch
          %498 = sbr.rel (%p496) target = $region76
        $region75: #{tpu_custom_call.1} parent=11 // pred_region
          _
        $region76: #{tpu_custom_call.1} parent=11 // pred_fallthru
          _
        // Predicated region
        $region77: #{tpu_custom_call.1} parent=11 // pred_check
          %p499 = pneg %p410
        $region78: #{tpu_custom_call.1} parent=11 // pred_check_branch
          %501 = sbr.rel (%p499) target = $region80
        $region79: #{tpu_custom_call.1} parent=11 // pred_region
          _
        $region80: #{tpu_custom_call.1} parent=11 // pred_fallthru
          _
      $region12: #{tpu_custom_call.1} parent=5 // pred_fallthru
        _
      %p502 = scmp.lt.s32.totalorder %s27, 2
      // Predicated region
      $region81: #{tpu_custom_call.1} parent=5 // pred_check
        %p503 = pneg %p502
      $region82: #{tpu_custom_call.1} parent=5 // pred_check_branch
        %505 = sbr.rel (%p503) target = $region84
      $region83: #{tpu_custom_call.1} parent=5 // pred_region
        // Predicated region
        $region85: #{tpu_custom_call.1} parent=83 // pred_check
          %p506 = pneg %p47
        $region86: #{tpu_custom_call.1} parent=83 // pred_check_branch
          %508 = sbr.rel (%p506) target = $region88
        $region87: #{tpu_custom_call.1} parent=83 // pred_region
          %p509 = scmp.lt.s32.totalorder %s27, 1
          %s510 = scalar_select %p509, %s27, 1
          %s511 = smul.addr %s510, 2
          %s512 = smul.addr %s511, 8
          %s513 = scalar_lea.vmem %s0, %s512
        $region88: #{tpu_custom_call.1} parent=83 // pred_fallthru
          _
      $region84: #{tpu_custom_call.1} parent=5 // pred_fallthru
        _
      %p514 = scmp.le.s32.totalorder 1, %s27
      %p515 = scmp.lt.s32.totalorder %s27, 3
      %p516 = pnand %p514, %p515
      %p517 = pneg %p516
      // Predicated region
      $region89: #{tpu_custom_call.1} parent=5 // pred_check
        _
      $region90: #{tpu_custom_call.1} parent=5 // pred_check_branch
        %519 = sbr.rel (%p516) target = $region92
      $region91: #{tpu_custom_call.1} parent=5 // pred_region
        %s520 = ssub.s32 %s27, 1
        %p521 = scmp.lt.s32.totalorder %s32, 1
        %s522 = scalar_select %p521, %s32, 1
        %s523 = smul.addr %s522, 2
        %s524 = smul.addr %s523, 8
        %s525 = scalar_lea.vmem %s0, %s524
        %p526 = pneg %p53
        %p527 = pneg %p50
        %p528 = pneg %p74
        %p529 = pneg %p71
        %p530 = pneg %p95
        %p531 = pneg %p92
        %p532 = pneg %p116
        %p533 = pneg %p113
        %p534 = pneg %p137
        %p535 = pneg %p134
        %p536 = pneg %p158
        %p537 = pneg %p155
        %p538 = pneg %p179
        %p539 = pneg %p176
        %p540 = pneg %p200
        %p541 = pneg %p197
        %p542 = pneg %p221
        %p543 = pneg %p218
        %p544 = pneg %p242
        %p545 = pneg %p239
        %p546 = pneg %p263
        %p547 = pneg %p260
        %p548 = pneg %p284
        %p549 = pneg %p281
        %p550 = pneg %p305
        %p551 = pneg %p302
        %p552 = pneg %p326
        %p553 = pneg %p323
        %p554 = pneg %p347
        %p555 = pneg %p344
        %p556 = pneg %p368
        %p557 = pneg %p365
        %p558 = pneg %p389
        %p559 = pneg %p386
        %p560 = pneg %p410
        %p561 = pneg %p407
        %p562 = pneg %p436
        %p563 = pneg %p433
        %s564 = sand.u32 %s423, 1
        %s565 = scalar_lea.sflag [#allocation3], %s564
        %s566 = sand.u32 %s423, 1
        %s567 = scalar_lea.vmem [#allocation2], %s566
        %p568 = scmp.lt.s32.totalorder %s32, 1
        %s569 = scalar_select %p568, %s32, 1
        %s570 = smul.addr %s569, 2
        %s571 = smul.addr %s570, 8
        %s572 = scalar_lea.vmem %s0, %s571
        %v574 = vld [vmem:[%s572] sm:$0xff]
        %v575 = vld [vmem:[%s572 + $0x8] sm:$0xff]
        %v576 = vld [vmem:[%s1] sm:$0x1]
        %v578 = vperm.slane %v576, 0
        %v580 = vmul.f32 %v574, %v578
        %v581 = vmul.f32 %v575, %v578
        %v582 = vld [vmem:[%s2] sm:$0x1]
        %v584 = vperm.slane %v582, 0
        %v586 = vadd.f32 %v580, %v584
        %v587 = vadd.f32 %v581, %v584
        %vm590 = vcmask 1041408
        %v591 = vrot.slane %v586, 6
        %v592 = vrot.slane %v587, 6
        %v593 = vsel %vm590, %v591, %v592
        %v596 = vsel %vm590, 0.0, %v591
        %vm598 = vcmask 1046528
        %v599 = vrot.slane %v596, 1
        %v600 = vrot.slane %v593, 1
        %v601 = vsel %vm598, %v599, %v600
        %v602 = vrot.slane %v592, 1
        %v603 = vsel %vm598, %v600, %v602
        %604 = vrot.lane.b32.xlu0 %v601, 4
        %v605 = vpop.permute.xlu0 %604
        %606 = vrot.lane.b32.xlu0 %v603, 4
        %v607 = vpop.permute.xlu0 %606
        %vm610 = vcmask 1045504
        %v611 = vrot.slane %v596, 2
        %v612 = vrot.slane %v593, 2
        %v613 = vsel %vm610, %v611, %v612
        %v614 = vrot.slane %v592, 2
        %v615 = vsel %vm610, %v612, %v614
        %616 = vrot.lane.b32.xlu0 %v613, 8
        %v617 = vpop.permute.xlu0 %616
        %618 = vrot.lane.b32.xlu0 %v615, 8
        %v619 = vpop.permute.xlu0 %618
        %vm622 = vcmask 31744
        %v623 = vsel %vm622, %v596, %v605
        %v624 = vsel %vm622, %v593, %v607
        %vm625 = vcmask 64512
        %v626 = vsel %vm625, %v623, %v617
        %v627 = vsel %vm625, %v624, %v619
        %v628 = vpack.c.bf16 %v627, %v626
        %v629 = vld [vmem:[%s3] sm:$0xf]
        %v630 = vld [vmem:[%s3 + $0x4] sm:$0x3]
        %v633 = vunpack.c.l.b16 %v629
        %v634 = vunpack.c.l.b16 %v630
        %v635 = vpack.c.b16 %v634, %v633
        %vm636 = vcmask 97280
        %v638 = vsel %vm636, %v628, 0
        %v641 = vsel %vm610, %v635, 0
        %643 = vmatpush.bf16.msra.mxu0 0
        %644 = vmatpush.bf16.msra.mxu0 0
        %645 = vmatpush.bf16.msra.mxu0 0
        %646 = vmatpush.bf16.msra.mxu0 0
        %647 = vmatpush.bf16.msra.mxu0 0
        %648 = vmatpush.bf16.msra.mxu0 0
        %649 = vmatpush.bf16.msra.mxu0 0
        %650 = vmatpush.bf16.msra.mxu0 %v641
        %651 = vmatmul.bf16.gmra.mxu0 %v638
        %v652 = vpop.f32.mrf.mxu0
        %v653 = vadd.f32 0.0, %v652
        %v654 = vpop.f32.mrf.mxu0
        %v655 = vadd.f32 0.0, %v654
        %656 = vdwg.mxu0
        %v657 = vld [vmem:[%s4] sm:$0x1]
        %v659 = vperm.slane %v657, 0
        %v661 = vmul.f32 %v653, %v659
        %v662 = vmul.f32 %v655, %v659
        %v663 = vld [vmem:[%s5] sm:$0x1]
        %v665 = vperm.slane %v663, 0
        %v667 = vadd.f32 %v661, %v665
        %v668 = vadd.f32 %v662, %v665
        %v669 = vmax.f32 %v667, 0.0
        %v670 = vmax.f32 %v668, 0.0
        %v671 = vpack.c.bf16 %v587, %v586
        %v672 = vld [vmem:[%s6] sm:$0x3]
        %v673 = vld [vmem:[%s7] sm:$0x1]
        %v675 = vperm.slane %v673, 0
        %v678 = vsel %vm622, %v671, 0
        %v681 = vsel %vm590, %v672, 0
        %683 = vmatpush.bf16.msra.mxu0 0
        %684 = vmatpush.bf16.msra.mxu0 0
        %685 = vmatpush.bf16.msra.mxu0 0
        %686 = vmatpush.bf16.msra.mxu0 0
        %687 = vmatpush.bf16.msra.mxu0 0
        %688 = vmatpush.bf16.msra.mxu0 0
        %689 = vmatpush.bf16.msra.mxu0 0
        %690 = vmatpush.bf16.msra.mxu0 %v681
        %691 = vmatmul.bf16.gmra.mxu0 %v678
        %v692 = vpop.f32.mrf.mxu0
        %v693 = vadd.f32 %v675, %v692
        %v694 = vpop.f32.mrf.mxu0
        %v695 = vadd.f32 %v675, %v694
        %696 = vdwg.mxu0
        %v697 = vadd.f32 %v669, %v693
        %v698 = vadd.f32 %v670, %v695
        %vm701 = vcmask 1043456
        %v702 = vrot.slane %v697, 4
        %v703 = vrot.slane %v698, 4
        %v704 = vsel %vm701, %v702, %v703
        %v707 = vsel %vm701, 0.0, %v702
        %v709 = vrot.slane %v707, 2
        %v710 = vrot.slane %v704, 2
        %v711 = vsel %vm610, %v709, %v710
        %v712 = vrot.slane %v703, 2
        %v713 = vsel %vm610, %v710, %v712
        %714 = vrot.lane.b32.xlu0 %v711, 8
        %v715 = vpop.permute.xlu0 %714
        %716 = vrot.lane.b32.xlu0 %v713, 8
        %v717 = vpop.permute.xlu0 %716
        %v720 = vrot.slane %v707, 4
        %v721 = vrot.slane %v704, 4
        %v722 = vsel %vm701, %v720, %v721
        %v723 = vrot.slane %v703, 4
        %v724 = vsel %vm701, %v721, %v723
        %725 = vrot.lane.b32.xlu0 %v722, 16
        %v726 = vpop.permute.xlu0 %725
        %727 = vrot.lane.b32.xlu0 %v724, 16
        %v728 = vpop.permute.xlu0 %727
        %v731 = vsel %vm625, %v707, %v715
        %v732 = vsel %vm625, %v704, %v717
        %vm733 = vcmask 130048
        %v734 = vsel %vm733, %v731, %v726
        %v735 = vsel %vm733, %v732, %v728
        %v736 = vpack.c.bf16 %v735, %v734
        %v737 = vld [vmem:[%s8] sm:$0xf]
        %v738 = vld [vmem:[%s8 + $0x4] sm:$0xf]
        %v739 = vld [vmem:[%s8 + $0x8] sm:$0xf]
        %v743 = vunpack.c.l.b16 %v737
        %v744 = vunpack.c.l.b16 %v738
        %v745 = vunpack.c.l.b16 %v739
        %v746 = vpack.c.b16 %v744, %v743
        %v747 = vpack.c.b16 %v745, %v745
        %vm749 = vcmask 195584
        %v751 = vsel %vm749, %v736, 0
        %v754 = vsel %vm701, %v747, 0
        %756 = vmatpush.bf16.msra.mxu0 0
        %757 = vmatpush.bf16.msra.mxu0 0
        %758 = vmatpush.bf16.msra.mxu0 0
        %759 = vmatpush.bf16.msra.mxu0 0
        %760 = vmatpush.bf16.msra.mxu0 0
        %761 = vmatpush.bf16.msra.mxu0 0
        %762 = vmatpush.bf16.msra.mxu0 %v754
        %763 = vmatpush.bf16.msra.mxu0 %v746
        %764 = vmatmul.bf16.gmra.mxu0 %v751
        %v765 = vpop.f32.mrf.mxu0
        %v766 = vadd.f32 0.0, %v765
        %v767 = vpop.f32.mrf.mxu0
        %v768 = vadd.f32 0.0, %v767
        %769 = vdwg.mxu0
        %v770 = vld [vmem:[%s9] sm:$0x1]
        %v772 = vperm.slane %v770, 0
        %v774 = vmul.f32 %v766, %v772
        %v775 = vmul.f32 %v768, %v772
        %v776 = vld [vmem:[%s10] sm:$0x1]
        %v778 = vperm.slane %v776, 0
        %v780 = vadd.f32 %v774, %v778
        %v781 = vadd.f32 %v775, %v778
        %v782 = vmax.f32 %v780, 0.0
        %v783 = vmax.f32 %v781, 0.0
        %v784 = vpack.c.bf16 %v698, %v697
        %v785 = vld [vmem:[%s11] sm:$0xf]
        %v786 = vld [vmem:[%s12] sm:$0x1]
        %v788 = vperm.slane %v786, 0
        %v791 = vsel %vm625, %v784, 0
        %v794 = vsel %vm701, %v785, 0
        %796 = vmatpush.bf16.msra.mxu0 0
        %797 = vmatpush.bf16.msra.mxu0 0
        %798 = vmatpush.bf16.msra.mxu0 0
        %799 = vmatpush.bf16.msra.mxu0 0
        %800 = vmatpush.bf16.msra.mxu0 0
        %801 = vmatpush.bf16.msra.mxu0 0
        %802 = vmatpush.bf16.msra.mxu0 0
        %803 = vmatpush.bf16.msra.mxu0 %v794
        %804 = vmatmul.bf16.gmra.mxu0 %v791
        %v805 = vpop.f32.mrf.mxu0
        %v806 = vadd.f32 %v788, %v805
        %v807 = vpop.f32.mrf.mxu0
        %v808 = vadd.f32 %v788, %v807
        %809 = vdwg.mxu0
        %v810 = vadd.f32 %v782, %v806
        %v811 = vadd.f32 %v783, %v808
        %v815 = vrot.slane 0.0, 4
        %v816 = vrot.slane %v810, 4
        %v817 = vsel %vm701, %v815, %v816
        %v818 = vrot.slane %v811, 4
        %v819 = vsel %vm701, %v816, %v818
        %820 = vrot.lane.b32.xlu0 %v817, 16
        %v821 = vpop.permute.xlu0 %820
        %822 = vrot.lane.b32.xlu0 %v819, 16
        %v823 = vpop.permute.xlu0 %822
        %826 = vrot.lane.b32.xlu0 %v810, 32
        %v827 = vpop.permute.xlu0 %826
        %828 = vrot.lane.b32.xlu0 %v811, 32
        %v829 = vpop.permute.xlu0 %828
        %v832 = vsel %vm733, 0.0, %v821
        %v833 = vsel %vm733, %v810, %v823
        %vm834 = vcmask 261120
        %v835 = vsel %vm834, %v832, %v827
        %v836 = vsel %vm834, %v833, %v829
        %v837 = vpack.c.bf16 %v836, %v835
        %v838 = vld [vmem:[%s13] sm:$0xf]
        %v839 = vld [vmem:[%s13 + $0x4] sm:$0xf]
        %v840 = vld [vmem:[%s13 + $0x8] sm:$0xf]
        %v841 = vld [vmem:[%s13 + $0xc] sm:$0xf]
        %v842 = vld [vmem:[%s13 + $0x10] sm:$0xf]
        %v843 = vld [vmem:[%s13 + $0x14] sm:$0xf]
        %v850 = vunpack.c.l.b16 %v838
        %v851 = vunpack.c.l.b16 %v839
        %v852 = vunpack.c.l.b16 %v840
        %v853 = vunpack.c.l.b16 %v841
        %v854 = vunpack.c.l.b16 %v842
        %v855 = vunpack.c.l.b16 %v843
        %v856 = vpack.c.b16 %v851, %v850
        %v857 = vpack.c.b16 %v853, %v852
        %v858 = vpack.c.b16 %v855, %v854
        %vm862 = vcmask 392192
        %v864 = vsel %vm862, %v837, 0
        %866 = vmatpush.bf16.msra.mxu0 0
        %867 = vmatpush.bf16.msra.mxu0 0
        %868 = vmatpush.bf16.msra.mxu0 0
        %869 = vmatpush.bf16.msra.mxu0 0
        %870 = vmatpush.bf16.msra.mxu0 0
        %871 = vmatpush.bf16.msra.mxu0 %v858
        %872 = vmatpush.bf16.msra.mxu0 %v857
        %873 = vmatpush.bf16.msra.mxu0 %v856
        %874 = vmatmul.bf16.gmra.mxu0 %v864
        %v875 = vpop.f32.mrf.mxu0
        %v876 = vadd.f32 0.0, %v875
        %v877 = vpop.f32.mrf.mxu0
        %v878 = vadd.f32 0.0, %v877
        %879 = vdwg.mxu0
        %v880 = vld [vmem:[%s14] sm:$0x1]
        %v882 = vperm.slane %v880, 0
        %v884 = vmul.f32 %v876, %v882
        %v885 = vmul.f32 %v878, %v882
        %v886 = vld [vmem:[%s15] sm:$0x1]
        %v888 = vperm.slane %v886, 0
        %v890 = vadd.f32 %v884, %v888
        %v891 = vadd.f32 %v885, %v888
        %v892 = vmax.f32 %v890, 0.0
        %v893 = vmax.f32 %v891, 0.0
        %v894 = vadd.f32 %v892, %v810
        %v895 = vadd.f32 %v893, %v811
        %v896 = vsel %vm733, %v894, 0.0
        %v897 = vsel %vm733, %v895, 0.0
        %v898 = vadd.f32 %v896, %v897
        %v899 = vrot.slane %v898, 4
        %v900 = vadd.f32 %v898, %v899
        %v901 = vrot.slane %v900, 2
        %v902 = vadd.f32 %v900, %v901
        %v903 = vrot.slane %v902, 1
        %v904 = vadd.f32 %v902, %v903
        %v905 = vrcp.pop 16.0
        %v906 = vmul.f32 16.0, %v905
        %v907 = vsub.f32 1.0, %v906
        %v908 = vmul.f32 %v905, %v907
        %v909 = vadd.f32 %v905, %v908
        %vm910 = vweird.f32 %v905
        %v911 = vsel %vm910, %v905, %v909
        %v912 = vmul.f32 %v904, %v911
        %v913 = vld [vmem:[%s16] sm:$0xff]
        %v914 = vld [vmem:[%s16 + $0x8] sm:$0xff]
        %v915 = vld [vmem:[%s17] sm:$0x1]
        %v917 = vsel %vm733, %v912, 0
        %919 = vmatpush.msra.mxu0 0.0
        %920 = vmatpush.msra.mxu0 0.0
        %921 = vmatpush.msra.mxu0 0.0
        %922 = vmatpush.msra.mxu0 0.0
        %923 = vmatpush.msra.mxu0 0.0
        %924 = vmatpush.msra.mxu0 0.0
        %925 = vmatpush.msra.mxu0 0.0
        %926 = vmatpush.msra.mxu0 0.0
        %927 = vmatpush.msra.mxu0 0.0
        %928 = vmatpush.msra.mxu0 0.0
        %929 = vmatpush.msra.mxu0 0.0
        %930 = vmatpush.msra.mxu0 0.0
        %931 = vmatpush.msra.mxu0 0.0
        %932 = vmatpush.msra.mxu0 0.0
        %933 = vmatpush.msra.mxu0 %v914
        %934 = vmatpush.msra.mxu0 %v913
        %935 = vmatmul.f32.gmra.mxu0 %v917
        %v936 = vpop.f32.mrf.mxu0
        %v937 = vadd.f32 %v915, %v936
        %938 = vdwg.mxu0
        %vm939 = vcmask 32768
        %940 = vst.msk [vmem:[%s567] sm:$0x1] %vm939, %v937
        %s941 = sand.u32 %s423, 1
        %s942 = scalar_lea.sflag [#allocation3], %s941
        %s943 = sand.u32 %s423, 1
        %s944 = scalar_lea.vmem [#allocation2], %s943
        // Predicated region
        $region93: #{tpu_custom_call.1} parent=91 // pred_check
          %p945 = pneg %p433
        $region94: #{tpu_custom_call.1} parent=91 // pred_check_branch
          %947 = sbr.rel (%p945) target = $region96
        $region95: #{tpu_custom_call.1} parent=91 // pred_region
          %949 = vsyncadd %s942, 0
          %s950 = scalar_lea.hbm %s18, %s32
          %s952 = sshll.u32 %s944, 4
          %s953 = int_to_ptr.vmem [resolvable:$true] %s952
          %s954 = sshll.u32 %s950, 4
          %s955 = int_to_ptr.hbm [resolvable:$true] %s954
          %957 = dma.vmem_to_hbm [thread:$0]  %s953, 16, %s955, %s942
        $region96: #{tpu_custom_call.1} parent=91 // pred_fallthru
          _
      $region92: #{tpu_custom_call.1} parent=5 // pred_fallthru
        _
      %p958 = scmp.le.s32.totalorder 2, %s27
      // Predicated region
      $region97: #{tpu_custom_call.1} parent=5 // pred_check
        %p959 = pneg %p958
      $region98: #{tpu_custom_call.1} parent=5 // pred_check_branch
        %961 = sbr.rel (%p959) target = $region100
      $region99: #{tpu_custom_call.1} parent=5 // pred_region
        %s962 = ssub.s32 %s27, 2
        // Predicated region
        $region101: #{tpu_custom_call.1} parent=99 // pred_check
          %p963 = pneg %p439
        $region102: #{tpu_custom_call.1} parent=99 // pred_check_branch
          %965 = sbr.rel (%p963) target = $region104
        $region103: #{tpu_custom_call.1} parent=99 // pred_region
          %s966 = sand.u32 %s424, 1
          %s967 = scalar_lea.sflag [#allocation3], %s966
          %s968 = sand.u32 %s424, 1
          %s969 = scalar_lea.vmem [#allocation2], %s968
          %971 = dma.done %s967, 16
        $region104: #{tpu_custom_call.1} parent=99 // pred_fallthru
          _
      $region100: #{tpu_custom_call.1} parent=5 // pred_fallthru
        _
    $region6: #{tpu_custom_call.1} parent=1 // loop_footer
      %s31 = sadd.s32 1, %s27
    $region7: #{tpu_custom_call.1} parent=1 // loop_footer_branch
      %26 = sbr.rel target = $region3
    $region8: #{tpu_custom_call.1} parent=1 // loop_exit
      _
    %972 = vsyncpa [#allocation3], 1
    %s973 = scalar_lea.sflag [#allocation3], 1
    %974 = vsyncpa %s973, 1

</llo_original>
